<compile_context>
chip_gen: v7x
topology: tpu7x:2x2x1
jax: 0.10.0
libtpu: 0.0.40
codegen_flags: <defaults>
</compile_context>

<pallas_src>
import functools

import jax
import jax.numpy as jnp
from jax.experimental import pallas as pl
from jax.experimental.pallas import tpu as pltpu


def _upsample_kernel(x_ref, o_ref, *, factor, precision):
    """x_ref: (rt, W) input rows; o_ref: (rt, f*f*W) lane-dense output rows."""
    W = x_ref.shape[-1]
    Wo = factor * W  # image output width

    # One-hot lane-replication matrix R[w, k] = 1 iff k // f == w, built on the
    # VPU each step (cheap, hides under DMA; avoids HBM/VMEM double-buffering).
    kcol = jax.lax.broadcasted_iota(jnp.int32, (W, Wo), 1)
    wrow = jax.lax.broadcasted_iota(jnp.int32, (W, Wo), 0)
    rep = jnp.logical_and(kcol >= wrow * factor,
                          kcol < (wrow + 1) * factor).astype(x_ref.dtype)

    # Width replication on the MXU: each output element gets exactly one 1*x
    # term, so this is bit-exact (f32 pinned to HIGHEST precision below).
    row = jnp.dot(x_ref[...], rep,
                  preferred_element_type=o_ref.dtype,
                  precision=precision)

    # Height replication: f plain lane-dense stores of the same row block.
    for di in range(factor):
        o_ref[:, di * Wo:(di + 1) * Wo] = row


def _vmem_capacity_bytes() -> int:
    try:
        return int(pltpu.get_tpu_info().vmem_capacity_bytes)
    except Exception:
        return 64 << 20  # conservative (v7x-sized) fallback


def _pick_row_tile(P: int, W: int, factor: int, itemsize: int,
                   target_bytes: int) -> int:
    """Rows per grid step: ~target_bytes of (in + temp + out) block, rounded to
    the dtype's sublane multiple (or 128), capped at ceil(P/2) so the parallel
    grid axis has at least 2 steps (feeds both v7x TensorCores)."""
    sub = max(8, 32 // itemsize)           # 8 for f32, 16 for bf16, 32 for int8
    if P <= sub:
        return P                           # full extent (satisfies block rules)
    per_row = (W + factor * W + factor * factor * W) * itemsize
    rt = max(sub, int(target_bytes) // per_row)
    rt = (rt // 128) * 128 if rt >= 128 else (rt // sub) * sub
    half = (((P + 1) // 2) + sub - 1) // sub * sub   # ceil(P/2) rounded up
    return max(sub, min(rt, half))


def upsample2_nearest(x: jax.Array, scale_factor, *,
                      block_target_bytes: int | None = None) -> jax.Array:
    """torch.nn.functional.interpolate(x, scale_factor, mode='nearest') for an
    NCHW input with an integer scale_factor."""
    factor = int(scale_factor)
    assert factor == scale_factor and factor >= 1, "integer scale_factor expected"
    N, C, H, W = x.shape
    Ho, Wo = H * factor, W * factor
    if factor == 1:
        return x

    itemsize = jnp.dtype(x.dtype).itemsize
    P = N * C * H
    x2 = x.reshape(P, W)                    # free contiguous reshape

    # Generation-aware VMEM budget: ~3/4 of physical, blocks ~1/6 of that
    # (double-buffered in+out blocks + matmul row temp stay well inside).
    vmem_cap = _vmem_capacity_bytes()
    vmem_limit = int(min((vmem_cap * 3) // 4, 96 << 20))
    if block_target_bytes is None:
        block_target_bytes = min(12 << 20, vmem_limit // 6)

    rt = _pick_row_tile(P, W, factor, itemsize, block_target_bytes)
    grid = (pl.cdiv(P, rt),)

    # Pin exact f32 matmul decomposition; bf16 accumulates one term -> exact.
    precision = jax.lax.Precision.HIGHEST if x.dtype == jnp.float32 else None
    kernel = functools.partial(_upsample_kernel, factor=factor,
                               precision=precision)

    out_flat = pl.pallas_call(
        kernel,
        out_shape=jax.ShapeDtypeStruct((P, factor * Wo), x.dtype),
        grid=grid,
        in_specs=[pl.BlockSpec((rt, W), lambda r: (r, 0))],
        out_specs=pl.BlockSpec((rt, factor * Wo), lambda r: (r, 0)),
        compiler_params=pltpu.CompilerParams(
            # independent row tiles: shards across v7x's 2 TensorCores.
            dimension_semantics=("parallel",),
            vmem_limit_bytes=vmem_limit,
        ),
    )(x2)

    # Flat element order of out_flat is ((n*C + c)*Ho + h*f + di)*Wo + (w*f + dj),
    # i.e. standard NCHW order of the upsampled tensor -> single free reshape.
    return out_flat.reshape(N, C, Ho, Wo)


if __name__ == "__main__":
    key = jax.random.PRNGKey(0)
    N, C, H, W = 2, 4, 16, 16
    factor = 2

    x = jax.random.normal(key, (N, C, H, W), dtype=jnp.float32)

    # Reference: identical to F.interpolate(x, scale_factor=factor, mode='nearest').
    ref = jnp.repeat(jnp.repeat(x, factor, axis=2), factor, axis=3)

    # 1) default (generation-aware) tiling
    y = jax.block_until_ready(upsample2_nearest(x, factor))
    assert y.shape == (N, C, H * factor, W * factor), y.shape
    assert y.dtype == x.dtype, y.dtype
    assert jnp.array_equal(y, ref), "mismatch vs reference (default tiling)"

    # 2) small tile target -> multi-step pipelined grid
    y2 = jax.block_until_ready(upsample2_nearest(x, factor, block_target_bytes=16 << 10))
    assert jnp.array_equal(y2, ref), "mismatch vs reference (tiled grid)"

    # 3) bf16 path: accumulates in the output dtype (no f32 intermediate), exact.
    xb = x.astype(jnp.bfloat16)
    refb = jnp.repeat(jnp.repeat(xb, factor, axis=2), factor, axis=3)
    yb = jax.block_until_ready(upsample2_nearest(xb, factor))
    assert yb.dtype == jnp.bfloat16
    assert jnp.array_equal(yb, refb), "mismatch vs reference (bf16)"

    print("KERNEL_OK")
</pallas_src>

<mosaic_0001>
module attributes {stable_mosaic.version = 11 : i64} {
  func.func @_upsample_kernel(%arg0: i32, %arg1: memref<64x16xf32, #tpu.memory_space<vmem>>, %arg2: memref<64x64xf32, #tpu.memory_space<vmem>>) attributes {dimension_semantics = [#tpu.dimension_semantics<parallel>], iteration_bounds = array<i64: 2>, scalar_prefetch = 0 : i64, scratch_operands = 0 : i64, tpu.core_type = #tpu.core_type<tc>, window_params = [{transform_indices = @transform_0, window_bounds = array<i64: 64, 16>}, {transform_indices = @transform_1, window_bounds = array<i64: 64, 64>}]} {
    %0 = tpu.iota {dimensions = array<i32: 1>} : vector<16x32xi32>
    %1 = tpu.iota {dimensions = array<i32: 0>} : vector<16x32xi32>
    %c2_i32 = arith.constant 2 : i32
    %2 = vector.broadcast %c2_i32 : i32 to vector<16x32xi32>
    %3 = arith.muli %1, %2 : vector<16x32xi32>
    %4 = arith.cmpi sge, %0, %3 : vector<16x32xi32>
    %c1_i32 = arith.constant 1 : i32
    %5 = vector.broadcast %c1_i32 : i32 to vector<16x32xi32>
    %6 = arith.addi %1, %5 : vector<16x32xi32>
    %c2_i32_0 = arith.constant 2 : i32
    %7 = vector.broadcast %c2_i32_0 : i32 to vector<16x32xi32>
    %8 = arith.muli %6, %7 : vector<16x32xi32>
    %9 = arith.cmpi slt, %0, %8 : vector<16x32xi32>
    %10 = arith.andi %4, %9 : vector<16x32xi1>
    %11 = arith.extui %10 : vector<16x32xi1> to vector<16x32xi32>
    %12 = arith.sitofp %11 : vector<16x32xi32> to vector<16x32xf32>
    %c0 = arith.constant 0 : index
    %c0_1 = arith.constant 0 : index
    %13 = vector.load %arg1[%c0, %c0_1] : memref<64x16xf32, #tpu.memory_space<vmem>>, vector<64x16xf32>
    %cst = arith.constant dense<0.000000e+00> : vector<64x32xf32>
    %14 = tpu.matmul %13, %12, %cst {dimension_numbers = #tpu.dot_dimension_numbers<[1], [0], [0], [1], [0, 0, 1, 1], [], []>, precision = #tpu.contract_precision<fp32>} : vector<64x16xf32>, vector<16x32xf32>, vector<64x32xf32> -> vector<64x32xf32>
    %c0_2 = arith.constant 0 : index
    %c0_3 = arith.constant 0 : index
    %15 = vector.load %arg2[%c0_2, %c0_3] : memref<64x64xf32, #tpu.memory_space<vmem>>, vector<64x32xf32>
    tpu.vector_store %arg2[%c0_2, %c0_3], %14 {strides = array<i32>} : memref<64x64xf32, #tpu.memory_space<vmem>>, vector<64x32xf32>,
    %c0_4 = arith.constant 0 : index
    %c32 = arith.constant 32 : index
    %16 = vector.load %arg2[%c0_4, %c32] : memref<64x64xf32, #tpu.memory_space<vmem>>, vector<64x32xf32>
    tpu.vector_store %arg2[%c0_4, %c32], %14 {strides = array<i32>} : memref<64x64xf32, #tpu.memory_space<vmem>>, vector<64x32xf32>,
    return
  }
  func.func @transform_0(%arg0: i32) -> (i32, i32) {
    %c0_i32 = arith.constant 0 : i32
    %c0_i32_0 = arith.constant 0 : i32
    return %arg0, %c0_i32 : i32, i32
  }
  func.func @transform_1(%arg0: i32) -> (i32, i32) {
    %c0_i32 = arith.constant 0 : i32
    %c0_i32_0 = arith.constant 0 : i32
    return %arg0, %c0_i32 : i32, i32
  }
}

</mosaic_0001>

<llo_original>
// kernel: tpu_custom_call.1
$region0: #{tpu_custom_call.1}
  #allocation0 [shape = 'u32[]', space=smem, size = 0x4, offset = 0x4, fixed_abs, tag = 'smem constant byte address 0x4 - core index']
  #allocation1 [shape = 'u32[144,128]{1,0:T(1,128)}', space=vmem, size = 0x12000, scoped, tag = 'internal scratch']
  %s0 = inlined_call_operand.vmem [shape: f32[128,16], index: 0, kind: input, shape index: {}]
  %s1 = inlined_call_operand.vmem [shape: f32[128,64], index: 1, kind: output, shape index: {}]
  %s2 = sld [smem:[#allocation0]]
  $region37: #{tpu_custom_call.1} parent=0
    _
  %s4 = ssub.s32 1, %s2
  %s5 = scalar_select 0, %s4, %s2
  loop: start=0, step=1, limit=4
  $region2: #{tpu_custom_call.1} parent=0 // loop_pre_header
    _
  $region3: #{tpu_custom_call.1} parent=0 // loop_header
    %s7 = sphi 0, %s11
    %p8 = scmp.ge.s32.totalorder %s7, 4
    %s17 = sphi 0, %s19
    %s20 = sphi 0, %s17
    %s21 = sphi 0, %s20
    %s37 = sphi 0, %s21
    %s43 = sphi 0, %s45
    %s46 = sphi 0, %s43
    %s47 = sphi 0, %s46
    %s63 = sphi 0, %s47
  $region4: #{tpu_custom_call.1} parent=0 // loop_header_branch
    %10 = sbr.rel (%p8) target = $region8
  $region5: #{tpu_custom_call.1} parent=0 // loop_body
    %s12 = ssub.s32 %s7, 1
    %s13 = ssub.s32 %s7, 2
    %s14 = sadd.s32 %s7, 1
    %s15 = ssub.s32 %s7, %s14
    %p16 = scmp.eq.s32.totalorder %s15, 0
    %s18 = sadd.s32 %s17, 1
    %s19 = scalar_select %p16, %s17, %s18
    %p22 = pneg %p16
    %p23 = scmp.eq.s32.totalorder %s7, 1
    %p24 = por %p22, %p23
    %p25 = scmp.ne.s32.totalorder %s17, %s20
    %p26 = scmp.eq.s32.totalorder %s7, 0
    %p27 = por %p25, %p26
    %p28 = scmp.ne.s32.totalorder %s17, %s20
    %p29 = scmp.eq.s32.totalorder %s12, 1
    %p30 = por %p28, %p29
    %p31 = scmp.ne.s32.totalorder %s20, %s21
    %p32 = scmp.eq.s32.totalorder %s12, 0
    %p33 = por %p31, %p32
    %p34 = scmp.ne.s32.totalorder %s20, %s21
    %p35 = scmp.eq.s32.totalorder %s13, 1
    %p36 = por %p34, %p35
    %p38 = scmp.ne.s32.totalorder %s21, %s37
    %p39 = scmp.eq.s32.totalorder %s13, 0
    %p40 = por %p38, %p39
    %s41 = ssub.s32 %s7, %s14
    %p42 = scmp.eq.s32.totalorder %s41, 0
    %s44 = sadd.s32 %s43, 1
    %s45 = scalar_select %p42, %s43, %s44
    %p48 = pneg %p42
    %p49 = scmp.eq.s32.totalorder %s7, 1
    %p50 = por %p48, %p49
    %p51 = scmp.ne.s32.totalorder %s43, %s46
    %p52 = scmp.eq.s32.totalorder %s7, 0
    %p53 = por %p51, %p52
    %p54 = scmp.ne.s32.totalorder %s43, %s46
    %p55 = scmp.eq.s32.totalorder %s12, 1
    %p56 = por %p54, %p55
    %p57 = scmp.ne.s32.totalorder %s46, %s47
    %p58 = scmp.eq.s32.totalorder %s12, 0
    %p59 = por %p57, %p58
    %p60 = scmp.ne.s32.totalorder %s46, %s47
    %p61 = scmp.eq.s32.totalorder %s13, 1
    %p62 = por %p60, %p61
    %p64 = scmp.ne.s32.totalorder %s47, %s63
    %p65 = scmp.eq.s32.totalorder %s13, 0
    %p66 = por %p64, %p65
    %p67 = scmp.le.s32.totalorder 1, %s7
    %p68 = scmp.lt.s32.totalorder %s7, 3
    %p69 = pnand %p67, %p68
    %p70 = pneg %p69
    // Predicated region
    $region9: #{tpu_custom_call.1} parent=5 // pred_check
      _
    $region10: #{tpu_custom_call.1} parent=5 // pred_check_branch
      %72 = sbr.rel (%p69) target = $region12
    $region11: #{tpu_custom_call.1} parent=5 // pred_region
      %s73 = ssub.s32 %s7, 1
    $region12: #{tpu_custom_call.1} parent=5 // pred_fallthru
      _
    %p74 = scmp.lt.s32.totalorder %s7, 2
    // Predicated region
    $region13: #{tpu_custom_call.1} parent=5 // pred_check
      %p75 = pneg %p74
    $region14: #{tpu_custom_call.1} parent=5 // pred_check_branch
      %77 = sbr.rel (%p75) target = $region16
    $region15: #{tpu_custom_call.1} parent=5 // pred_region
      // Predicated region
      $region17: #{tpu_custom_call.1} parent=15 // pred_check
        %p78 = pneg %p27
      $region18: #{tpu_custom_call.1} parent=15 // pred_check_branch
        %80 = sbr.rel (%p78) target = $region20
      $region19: #{tpu_custom_call.1} parent=15 // pred_region
        %s81 = smul.u32 8, %s7
        %p82 = scmp.lt.s32.totalorder %s81, 15
        %s83 = scalar_select %p82, %s81, 15
        %s84 = smul.addr %s83, 8
        %s85 = scalar_lea.vmem %s0, %s84
        %s86 = smul.u32 8, %s7
      $region20: #{tpu_custom_call.1} parent=15 // pred_fallthru
        _
    $region16: #{tpu_custom_call.1} parent=5 // pred_fallthru
      _
    %p87 = scmp.le.s32.totalorder 1, %s7
    %p88 = scmp.lt.s32.totalorder %s7, 3
    %p89 = pnand %p87, %p88
    %p90 = pneg %p89
    // Predicated region
    $region21: #{tpu_custom_call.1} parent=5 // pred_check
      _
    $region22: #{tpu_custom_call.1} parent=5 // pred_check_branch
      %92 = sbr.rel (%p89) target = $region24
    $region23: #{tpu_custom_call.1} parent=5 // pred_region
      %s93 = ssub.s32 %s7, 1
      %s94 = smul.u32 8, %s12
      %p95 = scmp.lt.s32.totalorder %s94, 15
      %s96 = scalar_select %p95, %s94, 15
      %s97 = smul.addr %s96, 8
      %s98 = scalar_lea.vmem %s0, %s97
      %p99 = pneg %p33
      %p100 = pneg %p30
      %p101 = pneg %p59
      %p102 = pneg %p56
      %s103 = smul.u32 8, %s12
      %p104 = scmp.lt.s32.totalorder %s103, 15
      %s105 = scalar_select %p104, %s103, 15
      %s106 = smul.addr %s105, 8
      %s107 = scalar_lea.vmem %s1, %s106
      %s108 = smul.u32 8, %s12
      %p109 = scmp.lt.s32.totalorder %s108, 15
      %s110 = scalar_select %p109, %s108, 15
      %s111 = smul.addr %s110, 8
      %s112 = scalar_lea.vmem %s0, %s111
      %s113 = smul.u32 8, %s12
      %s114 = smul.u32 8, %s12
      %p115 = scmp.lt.s32.totalorder %s114, 15
      %s116 = scalar_select %p115, %s114, 15
      %s117 = smul.addr %s116, 8
      %s118 = scalar_lea.vmem %s1, %s117
      %s119 = smul.u32 8, %s12
      %v120 = vlaneseq
      %v121 = vand.u32 %v120, 127
      %v122 = vlaneseq
      %v123 = vshrl.u32 %v122, 7
      %v124 = vadd.s32 %v123, 8
      %v125 = vmul.u32 %v123, 2
      %v126 = vmul.u32 %v124, 2
      %vm127 = vcmp.ge.s32.totalorder %v121, %v125
      %vm128 = vcmp.ge.s32.totalorder %v121, %v126
      %v129 = vadd.s32 %v123, 1
      %v130 = vadd.s32 %v124, 1
      %v131 = vmul.u32 %v129, 2
      %v132 = vmul.u32 %v130, 2
      %vm133 = vcmp.lt.s32.totalorder %v121, %v131
      %vm134 = vcmp.lt.s32.totalorder %v121, %v132
      %vm135 = vmand %vm127, %vm133
      %vm136 = vmand %vm128, %vm134
      %v137 = vsel %vm135, 1, 0
      %v138 = vsel %vm136, 1, 0
      %v139 = vcvt.s32.f32 %v137
      %v140 = vcvt.s32.f32 %v138
      %v141 = vld [vmem:[%s112] sm:$0xff]
      %v142 = vld [vmem:[%s112 + $0x8] sm:$0xff]
      %v143 = vld [vmem:[%s112 + $0x10] sm:$0xff]
      %v144 = vld [vmem:[%s112 + $0x18] sm:$0xff]
      %v145 = vld [vmem:[%s112 + $0x20] sm:$0xff]
      %v146 = vld [vmem:[%s112 + $0x28] sm:$0xff]
      %v147 = vld [vmem:[%s112 + $0x30] sm:$0xff]
      %v148 = vld [vmem:[%s112 + $0x38] sm:$0xff]
      %vm149 = vcmask 130048
      %v151 = vsel %vm149, %v141, 0
      %v154 = vsel %vm149, %v142, 0
      %v157 = vsel %vm149, %v143, 0
      %v160 = vsel %vm149, %v144, 0
      %v163 = vsel %vm149, %v145, 0
      %v166 = vsel %vm149, %v146, 0
      %v169 = vsel %vm149, %v147, 0
      %v172 = vsel %vm149, %v148, 0
      %174 = vmatprep.subr.mxu0 0.0
      %v175 = vand.u32 %v139, 4294901760
      %176 = vmatpush1.msra.mxu0 %v175
      %177 = vmatprep.subr.mxu0 0.0
      %v178 = vand.u32 %v140, 4294901760
      %179 = vmatpush1.msra.mxu0 %v178
      %180 = vmatprep.subr.mxu0 0.0
      %181 = vmatpush1.msra.mxu0 0.0
      %182 = vmatprep.subr.mxu0 0.0
      %183 = vmatpush1.msra.mxu0 0.0
      %184 = vmatprep.subr.mxu0 0.0
      %185 = vmatpush1.msra.mxu0 0.0
      %186 = vmatprep.subr.mxu0 0.0
      %187 = vmatpush1.msra.mxu0 0.0
      %188 = vmatprep.subr.mxu0 0.0
      %189 = vmatpush1.msra.mxu0 0.0
      %190 = vmatprep.subr.mxu0 0.0
      %191 = vmatpush1.msra.mxu0 0.0
      %192 = vmatprep.subr.mxu0 0.0
      %193 = vmatpush1.msra.mxu0 0.0
      %194 = vmatprep.subr.mxu0 0.0
      %195 = vmatpush1.msra.mxu0 0.0
      %196 = vmatprep.subr.mxu0 0.0
      %197 = vmatpush1.msra.mxu0 0.0
      %198 = vmatprep.subr.mxu0 0.0
      %199 = vmatpush1.msra.mxu0 0.0
      %200 = vmatprep.subr.mxu0 0.0
      %201 = vmatpush1.msra.mxu0 0.0
      %202 = vmatprep.subr.mxu0 0.0
      %203 = vmatpush1.msra.mxu0 0.0
      %204 = vmatprep.subr.mxu0 0.0
      %205 = vmatpush1.msra.mxu0 0.0
      %206 = vmatprep.subr.mxu0 0.0
      %207 = vmatpush1.msra.mxu0 0.0
      %208 = vmatprep.subr.mxu0 0.0
      %209 = vmatpush1.msra.mxu0 0.0
      %210 = vmatprep.subr.mxu0 0.0
      %211 = vmatpush1.msra.mxu0 0.0
      %212 = vmatprep.subr.mxu0 0.0
      %213 = vmatpush1.msra.mxu0 0.0
      %214 = vmatprep.subr.mxu0 0.0
      %215 = vmatpush1.msra.mxu0 0.0
      %216 = vmatprep.subr.mxu0 0.0
      %217 = vmatpush1.msra.mxu0 0.0
      %218 = vmatprep.subr.mxu0 0.0
      %219 = vmatpush1.msra.mxu0 0.0
      %220 = vmatprep.subr.mxu0 0.0
      %221 = vmatpush1.msra.mxu0 0.0
      %222 = vmatprep.subr.mxu0 0.0
      %223 = vmatpush1.msra.mxu0 0.0
      %224 = vmatprep.subr.mxu0 0.0
      %225 = vmatpush1.msra.mxu0 0.0
      %226 = vmatprep.subr.mxu0 0.0
      %227 = vmatpush1.msra.mxu0 0.0
      %228 = vmatprep.subr.mxu0 0.0
      %229 = vmatpush1.msra.mxu0 0.0
      %230 = vmatprep.subr.mxu0 0.0
      %231 = vmatpush1.msra.mxu0 0.0
      %232 = vmatprep.subr.mxu0 0.0
      %233 = vmatpush1.msra.mxu0 0.0
      %234 = vmatprep.subr.mxu0 0.0
      %235 = vmatpush1.msra.mxu0 0.0
      %236 = vmatprep.subr.mxu0 0.0
      %237 = vmatpush1.msra.mxu0 0.0
      %238 = vmatprep.subr.mxu0 0.0
      %239 = vmatpush1.msra.mxu0 0.0
      %240 = vmatprep.mubr.f32.mxu0 0.0
      %v241 = vand.u32 %v151, 4294901760
      %v242 = vsub.f32 %v151, %v241
      %v243 = vand.u32 %v242, 4294901760
      %v244 = vsub.f32 %v242, %v243
      %v245 = vand.u32 %v244, 4294901760
      %246 = vmatmul.mubr.f32.gmra.mrb[0].mxu0 %v245
      %v247 = vpop.f32.mrb[0].mxu0
      %v248 = vadd.f32 0.0, %v247
      %v249 = vpop.f32.mrb[0].mxu0
      %250 = vmatprep.mubr.f32.mxu0 0.0
      %v251 = vand.u32 %v154, 4294901760
      %v252 = vsub.f32 %v154, %v251
      %v253 = vand.u32 %v252, 4294901760
      %v254 = vsub.f32 %v252, %v253
      %v255 = vand.u32 %v254, 4294901760
      %256 = vmatmul.mubr.f32.gmra.mrb[0].mxu0 %v255
      %v257 = vpop.f32.mrb[0].mxu0
      %v258 = vadd.f32 0.0, %v257
      %v259 = vpop.f32.mrb[0].mxu0
      %260 = vmatprep.mubr.f32.mxu0 0.0
      %v261 = vand.u32 %v157, 4294901760
      %v262 = vsub.f32 %v157, %v261
      %v263 = vand.u32 %v262, 4294901760
      %v264 = vsub.f32 %v262, %v263
      %v265 = vand.u32 %v264, 4294901760
      %266 = vmatmul.mubr.f32.gmra.mrb[0].mxu0 %v265
      %v267 = vpop.f32.mrb[0].mxu0
      %v268 = vadd.f32 0.0, %v267
      %v269 = vpop.f32.mrb[0].mxu0
      %270 = vmatprep.mubr.f32.mxu0 0.0
      %v271 = vand.u32 %v160, 4294901760
      %v272 = vsub.f32 %v160, %v271
      %v273 = vand.u32 %v272, 4294901760
      %v274 = vsub.f32 %v272, %v273
      %v275 = vand.u32 %v274, 4294901760
      %276 = vmatmul.mubr.f32.gmra.mrb[0].mxu0 %v275
      %v277 = vpop.f32.mrb[0].mxu0
      %v278 = vadd.f32 0.0, %v277
      %v279 = vpop.f32.mrb[0].mxu0
      %280 = vmatprep.mubr.f32.mxu0 0.0
      %v281 = vand.u32 %v163, 4294901760
      %v282 = vsub.f32 %v163, %v281
      %v283 = vand.u32 %v282, 4294901760
      %v284 = vsub.f32 %v282, %v283
      %v285 = vand.u32 %v284, 4294901760
      %286 = vmatmul.mubr.f32.gmra.mrb[0].mxu0 %v285
      %v287 = vpop.f32.mrb[0].mxu0
      %v288 = vadd.f32 0.0, %v287
      %v289 = vpop.f32.mrb[0].mxu0
      %290 = vmatprep.mubr.f32.mxu0 0.0
      %v291 = vand.u32 %v166, 4294901760
      %v292 = vsub.f32 %v166, %v291
      %v293 = vand.u32 %v292, 4294901760
      %v294 = vsub.f32 %v292, %v293
      %v295 = vand.u32 %v294, 4294901760
      %296 = vmatmul.mubr.f32.gmra.mrb[0].mxu0 %v295
      %v297 = vpop.f32.mrb[0].mxu0
      %v298 = vadd.f32 0.0, %v297
      %v299 = vpop.f32.mrb[0].mxu0
      %300 = vmatprep.mubr.f32.mxu0 0.0
      %v301 = vand.u32 %v169, 4294901760
      %v302 = vsub.f32 %v169, %v301
      %v303 = vand.u32 %v302, 4294901760
      %v304 = vsub.f32 %v302, %v303
      %v305 = vand.u32 %v304, 4294901760
      %306 = vmatmul.mubr.f32.gmra.mrb[0].mxu0 %v305
      %v307 = vpop.f32.mrb[0].mxu0
      %v308 = vadd.f32 0.0, %v307
      %v309 = vpop.f32.mrb[0].mxu0
      %310 = vmatprep.mubr.f32.mxu0 0.0
      %v311 = vand.u32 %v172, 4294901760
      %v312 = vsub.f32 %v172, %v311
      %v313 = vand.u32 %v312, 4294901760
      %v314 = vsub.f32 %v312, %v313
      %v315 = vand.u32 %v314, 4294901760
      %316 = vmatmul.mubr.f32.gmra.mrb[0].mxu0 %v315
      %v317 = vpop.f32.mrb[0].mxu0
      %v318 = vadd.f32 0.0, %v317
      %v319 = vpop.f32.mrb[0].mxu0
      %320 = vdwg.mxu0
      %321 = vmatprep.subr.mxu0 0.0
      %v322 = vand.u32 %v139, 4294901760
      %v323 = vsub.f32 %v139, %v322
      %v324 = vand.u32 %v323, 4294901760
      %v325 = vsub.f32 %v323, %v324
      %v326 = vand.u32 %v325, 4294901760
      %327 = vmatpush1.msra.mxu0 %v326
      %328 = vmatprep.subr.mxu0 0.0
      %v329 = vand.u32 %v140, 4294901760
      %v330 = vsub.f32 %v140, %v329
      %v331 = vand.u32 %v330, 4294901760
      %v332 = vsub.f32 %v330, %v331
      %v333 = vand.u32 %v332, 4294901760
      %334 = vmatpush1.msra.mxu0 %v333
      %335 = vmatprep.subr.mxu0 0.0
      %336 = vmatpush1.msra.mxu0 0.0
      %337 = vmatprep.subr.mxu0 0.0
      %338 = vmatpush1.msra.mxu0 0.0
      %339 = vmatprep.subr.mxu0 0.0
      %340 = vmatpush1.msra.mxu0 0.0
      %341 = vmatprep.subr.mxu0 0.0
      %342 = vmatpush1.msra.mxu0 0.0
      %343 = vmatprep.subr.mxu0 0.0
      %344 = vmatpush1.msra.mxu0 0.0
      %345 = vmatprep.subr.mxu0 0.0
      %346 = vmatpush1.msra.mxu0 0.0
      %347 = vmatprep.subr.mxu0 0.0
      %348 = vmatpush1.msra.mxu0 0.0
      %349 = vmatprep.subr.mxu0 0.0
      %350 = vmatpush1.msra.mxu0 0.0
      %351 = vmatprep.subr.mxu0 0.0
      %352 = vmatpush1.msra.mxu0 0.0
      %353 = vmatprep.subr.mxu0 0.0
      %354 = vmatpush1.msra.mxu0 0.0
      %355 = vmatprep.subr.mxu0 0.0
      %356 = vmatpush1.msra.mxu0 0.0
      %357 = vmatprep.subr.mxu0 0.0
      %358 = vmatpush1.msra.mxu0 0.0
      %359 = vmatprep.subr.mxu0 0.0
      %360 = vmatpush1.msra.mxu0 0.0
      %361 = vmatprep.subr.mxu0 0.0
      %362 = vmatpush1.msra.mxu0 0.0
      %363 = vmatprep.subr.mxu0 0.0
      %364 = vmatpush1.msra.mxu0 0.0
      %365 = vmatprep.subr.mxu0 0.0
      %366 = vmatpush1.msra.mxu0 0.0
      %367 = vmatprep.subr.mxu0 0.0
      %368 = vmatpush1.msra.mxu0 0.0
      %369 = vmatprep.subr.mxu0 0.0
      %370 = vmatpush1.msra.mxu0 0.0
      %371 = vmatprep.subr.mxu0 0.0
      %372 = vmatpush1.msra.mxu0 0.0
      %373 = vmatprep.subr.mxu0 0.0
      %374 = vmatpush1.msra.mxu0 0.0
      %375 = vmatprep.subr.mxu0 0.0
      %376 = vmatpush1.msra.mxu0 0.0
      %377 = vmatprep.subr.mxu0 0.0
      %378 = vmatpush1.msra.mxu0 0.0
      %379 = vmatprep.subr.mxu0 0.0
      %380 = vmatpush1.msra.mxu0 0.0
      %381 = vmatprep.subr.mxu0 0.0
      %382 = vmatpush1.msra.mxu0 0.0
      %383 = vmatprep.subr.mxu0 0.0
      %384 = vmatpush1.msra.mxu0 0.0
      %385 = vmatprep.subr.mxu0 0.0
      %386 = vmatpush1.msra.mxu0 0.0
      %387 = vmatprep.subr.mxu0 0.0
      %388 = vmatpush1.msra.mxu0 0.0
      %389 = vmatprep.subr.mxu0 0.0
      %390 = vmatpush1.msra.mxu0 0.0
      %391 = vmatprep.subr.mxu0 0.0
      %392 = vmatpush1.msra.mxu0 0.0
      %393 = vmatprep.subr.mxu0 0.0
      %394 = vmatpush1.msra.mxu0 0.0
      %395 = vmatprep.mubr.f32.mxu0 0.0
      %v396 = vand.u32 %v151, 4294901760
      %397 = vmatmul.mubr.f32.gmra.mrb[0].mxu0 %v396
      %v398 = vpop.f32.mrb[0].mxu0
      %v399 = vadd.f32 %v248, %v398
      %v400 = vpop.f32.mrb[0].mxu0
      %401 = vmatprep.mubr.f32.mxu0 0.0
      %v402 = vand.u32 %v154, 4294901760
      %403 = vmatmul.mubr.f32.gmra.mrb[0].mxu0 %v402
      %v404 = vpop.f32.mrb[0].mxu0
      %v405 = vadd.f32 %v258, %v404
      %v406 = vpop.f32.mrb[0].mxu0
      %407 = vmatprep.mubr.f32.mxu0 0.0
      %v408 = vand.u32 %v157, 4294901760
      %409 = vmatmul.mubr.f32.gmra.mrb[0].mxu0 %v408
      %v410 = vpop.f32.mrb[0].mxu0
      %v411 = vadd.f32 %v268, %v410
      %v412 = vpop.f32.mrb[0].mxu0
      %413 = vmatprep.mubr.f32.mxu0 0.0
      %v414 = vand.u32 %v160, 4294901760
      %415 = vmatmul.mubr.f32.gmra.mrb[0].mxu0 %v414
      %v416 = vpop.f32.mrb[0].mxu0
      %v417 = vadd.f32 %v278, %v416
      %v418 = vpop.f32.mrb[0].mxu0
      %419 = vmatprep.mubr.f32.mxu0 0.0
      %v420 = vand.u32 %v163, 4294901760
      %421 = vmatmul.mubr.f32.gmra.mrb[0].mxu0 %v420
      %v422 = vpop.f32.mrb[0].mxu0
      %v423 = vadd.f32 %v288, %v422
      %v424 = vpop.f32.mrb[0].mxu0
      %425 = vmatprep.mubr.f32.mxu0 0.0
      %v426 = vand.u32 %v166, 4294901760
      %427 = vmatmul.mubr.f32.gmra.mrb[0].mxu0 %v426
      %v428 = vpop.f32.mrb[0].mxu0
      %v429 = vadd.f32 %v298, %v428
      %v430 = vpop.f32.mrb[0].mxu0
      %431 = vmatprep.mubr.f32.mxu0 0.0
      %v432 = vand.u32 %v169, 4294901760
      %433 = vmatmul.mubr.f32.gmra.mrb[0].mxu0 %v432
      %v434 = vpop.f32.mrb[0].mxu0
      %v435 = vadd.f32 %v308, %v434
      %v436 = vpop.f32.mrb[0].mxu0
      %437 = vmatprep.mubr.f32.mxu0 0.0
      %v438 = vand.u32 %v172, 4294901760
      %439 = vmatmul.mubr.f32.gmra.mrb[0].mxu0 %v438
      %v440 = vpop.f32.mrb[0].mxu0
      %v441 = vadd.f32 %v318, %v440
      %v442 = vpop.f32.mrb[0].mxu0
      %443 = vdwg.mxu0
      %444 = vmatprep.subr.mxu0 0.0
      %v445 = vand.u32 %v139, 4294901760
      %v446 = vsub.f32 %v139, %v445
      %447 = vmatpush1.msra.mxu0 %v446
      %448 = vmatprep.subr.mxu0 0.0
      %v449 = vand.u32 %v140, 4294901760
      %v450 = vsub.f32 %v140, %v449
      %451 = vmatpush1.msra.mxu0 %v450
      %452 = vmatprep.subr.mxu0 0.0
      %453 = vmatpush1.msra.mxu0 0.0
      %454 = vmatprep.subr.mxu0 0.0
      %455 = vmatpush1.msra.mxu0 0.0
      %456 = vmatprep.subr.mxu0 0.0
      %457 = vmatpush1.msra.mxu0 0.0
      %458 = vmatprep.subr.mxu0 0.0
      %459 = vmatpush1.msra.mxu0 0.0
      %460 = vmatprep.subr.mxu0 0.0
      %461 = vmatpush1.msra.mxu0 0.0
      %462 = vmatprep.subr.mxu0 0.0
      %463 = vmatpush1.msra.mxu0 0.0
      %464 = vmatprep.subr.mxu0 0.0
      %465 = vmatpush1.msra.mxu0 0.0
      %466 = vmatprep.subr.mxu0 0.0
      %467 = vmatpush1.msra.mxu0 0.0
      %468 = vmatprep.subr.mxu0 0.0
      %469 = vmatpush1.msra.mxu0 0.0
      %470 = vmatprep.subr.mxu0 0.0
      %471 = vmatpush1.msra.mxu0 0.0
      %472 = vmatprep.subr.mxu0 0.0
      %473 = vmatpush1.msra.mxu0 0.0
      %474 = vmatprep.subr.mxu0 0.0
      %475 = vmatpush1.msra.mxu0 0.0
      %476 = vmatprep.subr.mxu0 0.0
      %477 = vmatpush1.msra.mxu0 0.0
      %478 = vmatprep.subr.mxu0 0.0
      %479 = vmatpush1.msra.mxu0 0.0
      %480 = vmatprep.subr.mxu0 0.0
      %481 = vmatpush1.msra.mxu0 0.0
      %482 = vmatprep.subr.mxu0 0.0
      %483 = vmatpush1.msra.mxu0 0.0
      %484 = vmatprep.subr.mxu0 0.0
      %485 = vmatpush1.msra.mxu0 0.0
      %486 = vmatprep.subr.mxu0 0.0
      %487 = vmatpush1.msra.mxu0 0.0
      %488 = vmatprep.subr.mxu0 0.0
      %489 = vmatpush1.msra.mxu0 0.0
      %490 = vmatprep.subr.mxu0 0.0
      %491 = vmatpush1.msra.mxu0 0.0
      %492 = vmatprep.subr.mxu0 0.0
      %493 = vmatpush1.msra.mxu0 0.0
      %494 = vmatprep.subr.mxu0 0.0
      %495 = vmatpush1.msra.mxu0 0.0
      %496 = vmatprep.subr.mxu0 0.0
      %497 = vmatpush1.msra.mxu0 0.0
      %498 = vmatprep.subr.mxu0 0.0
      %499 = vmatpush1.msra.mxu0 0.0
      %500 = vmatprep.subr.mxu0 0.0
      %501 = vmatpush1.msra.mxu0 0.0
      %502 = vmatprep.subr.mxu0 0.0
      %503 = vmatpush1.msra.mxu0 0.0
      %504 = vmatprep.subr.mxu0 0.0
      %505 = vmatpush1.msra.mxu0 0.0
      %506 = vmatprep.subr.mxu0 0.0
      %507 = vmatpush1.msra.mxu0 0.0
      %508 = vmatprep.subr.mxu0 0.0
      %509 = vmatpush1.msra.mxu0 0.0
      %510 = vmatprep.subr.mxu0 0.0
      %511 = vmatpush1.msra.mxu0 0.0
      %512 = vmatprep.mubr.f32.mxu0 0.0
      %v513 = vand.u32 %v151, 4294901760
      %v514 = vsub.f32 %v151, %v513
      %515 = vmatmul.mubr.f32.gmra.mrb[0].mxu0 %v514
      %v516 = vpop.f32.mrb[0].mxu0
      %v517 = vadd.f32 %v399, %v516
      %v518 = vpop.f32.mrb[0].mxu0
      %519 = vmatprep.mubr.f32.mxu0 0.0
      %v520 = vand.u32 %v154, 4294901760
      %v521 = vsub.f32 %v154, %v520
      %522 = vmatmul.mubr.f32.gmra.mrb[0].mxu0 %v521
      %v523 = vpop.f32.mrb[0].mxu0
      %v524 = vadd.f32 %v405, %v523
      %v525 = vpop.f32.mrb[0].mxu0
      %526 = vmatprep.mubr.f32.mxu0 0.0
      %v527 = vand.u32 %v157, 4294901760
      %v528 = vsub.f32 %v157, %v527
      %529 = vmatmul.mubr.f32.gmra.mrb[0].mxu0 %v528
      %v530 = vpop.f32.mrb[0].mxu0
      %v531 = vadd.f32 %v411, %v530
      %v532 = vpop.f32.mrb[0].mxu0
      %533 = vmatprep.mubr.f32.mxu0 0.0
      %v534 = vand.u32 %v160, 4294901760
      %v535 = vsub.f32 %v160, %v534
      %536 = vmatmul.mubr.f32.gmra.mrb[0].mxu0 %v535
      %v537 = vpop.f32.mrb[0].mxu0
      %v538 = vadd.f32 %v417, %v537
      %v539 = vpop.f32.mrb[0].mxu0
      %540 = vmatprep.mubr.f32.mxu0 0.0
      %v541 = vand.u32 %v163, 4294901760
      %v542 = vsub.f32 %v163, %v541
      %543 = vmatmul.mubr.f32.gmra.mrb[0].mxu0 %v542
      %v544 = vpop.f32.mrb[0].mxu0
      %v545 = vadd.f32 %v423, %v544
      %v546 = vpop.f32.mrb[0].mxu0
      %547 = vmatprep.mubr.f32.mxu0 0.0
      %v548 = vand.u32 %v166, 4294901760
      %v549 = vsub.f32 %v166, %v548
      %550 = vmatmul.mubr.f32.gmra.mrb[0].mxu0 %v549
      %v551 = vpop.f32.mrb[0].mxu0
      %v552 = vadd.f32 %v429, %v551
      %v553 = vpop.f32.mrb[0].mxu0
      %554 = vmatprep.mubr.f32.mxu0 0.0
      %v555 = vand.u32 %v169, 4294901760
      %v556 = vsub.f32 %v169, %v555
      %557 = vmatmul.mubr.f32.gmra.mrb[0].mxu0 %v556
      %v558 = vpop.f32.mrb[0].mxu0
      %v559 = vadd.f32 %v435, %v558
      %v560 = vpop.f32.mrb[0].mxu0
      %561 = vmatprep.mubr.f32.mxu0 0.0
      %v562 = vand.u32 %v172, 4294901760
      %v563 = vsub.f32 %v172, %v562
      %564 = vmatmul.mubr.f32.gmra.mrb[0].mxu0 %v563
      %v565 = vpop.f32.mrb[0].mxu0
      %v566 = vadd.f32 %v441, %v565
      %v567 = vpop.f32.mrb[0].mxu0
      %568 = vdwg.mxu0
      %569 = vmatprep.subr.mxu0 0.0
      %v570 = vand.u32 %v139, 4294901760
      %571 = vmatpush1.msra.mxu0 %v570
      %572 = vmatprep.subr.mxu0 0.0
      %v573 = vand.u32 %v140, 4294901760
      %574 = vmatpush1.msra.mxu0 %v573
      %575 = vmatprep.subr.mxu0 0.0
      %576 = vmatpush1.msra.mxu0 0.0
      %577 = vmatprep.subr.mxu0 0.0
      %578 = vmatpush1.msra.mxu0 0.0
      %579 = vmatprep.subr.mxu0 0.0
      %580 = vmatpush1.msra.mxu0 0.0
      %581 = vmatprep.subr.mxu0 0.0
      %582 = vmatpush1.msra.mxu0 0.0
      %583 = vmatprep.subr.mxu0 0.0
      %584 = vmatpush1.msra.mxu0 0.0
      %585 = vmatprep.subr.mxu0 0.0
      %586 = vmatpush1.msra.mxu0 0.0
      %587 = vmatprep.subr.mxu0 0.0
      %588 = vmatpush1.msra.mxu0 0.0
      %589 = vmatprep.subr.mxu0 0.0
      %590 = vmatpush1.msra.mxu0 0.0
      %591 = vmatprep.subr.mxu0 0.0
      %592 = vmatpush1.msra.mxu0 0.0
      %593 = vmatprep.subr.mxu0 0.0
      %594 = vmatpush1.msra.mxu0 0.0
      %595 = vmatprep.subr.mxu0 0.0
      %596 = vmatpush1.msra.mxu0 0.0
      %597 = vmatprep.subr.mxu0 0.0
      %598 = vmatpush1.msra.mxu0 0.0
      %599 = vmatprep.subr.mxu0 0.0
      %600 = vmatpush1.msra.mxu0 0.0
      %601 = vmatprep.subr.mxu0 0.0
      %602 = vmatpush1.msra.mxu0 0.0
      %603 = vmatprep.subr.mxu0 0.0
      %604 = vmatpush1.msra.mxu0 0.0
      %605 = vmatprep.subr.mxu0 0.0
      %606 = vmatpush1.msra.mxu0 0.0
      %607 = vmatprep.subr.mxu0 0.0
      %608 = vmatpush1.msra.mxu0 0.0
      %609 = vmatprep.subr.mxu0 0.0
      %610 = vmatpush1.msra.mxu0 0.0
      %611 = vmatprep.subr.mxu0 0.0
      %612 = vmatpush1.msra.mxu0 0.0
      %613 = vmatprep.subr.mxu0 0.0
      %614 = vmatpush1.msra.mxu0 0.0
      %615 = vmatprep.subr.mxu0 0.0
      %616 = vmatpush1.msra.mxu0 0.0
      %617 = vmatprep.subr.mxu0 0.0
      %618 = vmatpush1.msra.mxu0 0.0
      %619 = vmatprep.subr.mxu0 0.0
      %620 = vmatpush1.msra.mxu0 0.0
      %621 = vmatprep.subr.mxu0 0.0
      %622 = vmatpush1.msra.mxu0 0.0
      %623 = vmatprep.subr.mxu0 0.0
      %624 = vmatpush1.msra.mxu0 0.0
      %625 = vmatprep.subr.mxu0 0.0
      %626 = vmatpush1.msra.mxu0 0.0
      %627 = vmatprep.subr.mxu0 0.0
      %628 = vmatpush1.msra.mxu0 0.0
      %629 = vmatprep.subr.mxu0 0.0
      %630 = vmatpush1.msra.mxu0 0.0
      %631 = vmatprep.subr.mxu0 0.0
      %632 = vmatpush1.msra.mxu0 0.0
      %633 = vmatprep.subr.mxu0 0.0
      %634 = vmatpush1.msra.mxu0 0.0
      %635 = vmatprep.mubr.f32.mxu0 0.0
      %v636 = vand.u32 %v151, 4294901760
      %v637 = vsub.f32 %v151, %v636
      %v638 = vand.u32 %v637, 4294901760
      %639 = vmatmul.mubr.f32.gmra.mrb[0].mxu0 %v638
      %v640 = vpop.f32.mrb[0].mxu0
      %v641 = vadd.f32 %v517, %v640
      %v642 = vpop.f32.mrb[0].mxu0
      %643 = vmatprep.mubr.f32.mxu0 0.0
      %v644 = vand.u32 %v154, 4294901760
      %v645 = vsub.f32 %v154, %v644
      %v646 = vand.u32 %v645, 4294901760
      %647 = vmatmul.mubr.f32.gmra.mrb[0].mxu0 %v646
      %v648 = vpop.f32.mrb[0].mxu0
      %v649 = vadd.f32 %v524, %v648
      %v650 = vpop.f32.mrb[0].mxu0
      %651 = vmatprep.mubr.f32.mxu0 0.0
      %v652 = vand.u32 %v157, 4294901760
      %v653 = vsub.f32 %v157, %v652
      %v654 = vand.u32 %v653, 4294901760
      %655 = vmatmul.mubr.f32.gmra.mrb[0].mxu0 %v654
      %v656 = vpop.f32.mrb[0].mxu0
      %v657 = vadd.f32 %v531, %v656
      %v658 = vpop.f32.mrb[0].mxu0
      %659 = vmatprep.mubr.f32.mxu0 0.0
      %v660 = vand.u32 %v160, 4294901760
      %v661 = vsub.f32 %v160, %v660
      %v662 = vand.u32 %v661, 4294901760
      %663 = vmatmul.mubr.f32.gmra.mrb[0].mxu0 %v662
      %v664 = vpop.f32.mrb[0].mxu0
      %v665 = vadd.f32 %v538, %v664
      %v666 = vpop.f32.mrb[0].mxu0
      %667 = vmatprep.mubr.f32.mxu0 0.0
      %v668 = vand.u32 %v163, 4294901760
      %v669 = vsub.f32 %v163, %v668
      %v670 = vand.u32 %v669, 4294901760
      %671 = vmatmul.mubr.f32.gmra.mrb[0].mxu0 %v670
      %v672 = vpop.f32.mrb[0].mxu0
      %v673 = vadd.f32 %v545, %v672
      %v674 = vpop.f32.mrb[0].mxu0
      %675 = vmatprep.mubr.f32.mxu0 0.0
      %v676 = vand.u32 %v166, 4294901760
      %v677 = vsub.f32 %v166, %v676
      %v678 = vand.u32 %v677, 4294901760
      %679 = vmatmul.mubr.f32.gmra.mrb[0].mxu0 %v678
      %v680 = vpop.f32.mrb[0].mxu0
      %v681 = vadd.f32 %v552, %v680
      %v682 = vpop.f32.mrb[0].mxu0
      %683 = vmatprep.mubr.f32.mxu0 0.0
      %v684 = vand.u32 %v169, 4294901760
      %v685 = vsub.f32 %v169, %v684
      %v686 = vand.u32 %v685, 4294901760
      %687 = vmatmul.mubr.f32.gmra.mrb[0].mxu0 %v686
      %v688 = vpop.f32.mrb[0].mxu0
      %v689 = vadd.f32 %v559, %v688
      %v690 = vpop.f32.mrb[0].mxu0
      %691 = vmatprep.mubr.f32.mxu0 0.0
      %v692 = vand.u32 %v172, 4294901760
      %v693 = vsub.f32 %v172, %v692
      %v694 = vand.u32 %v693, 4294901760
      %695 = vmatmul.mubr.f32.gmra.mrb[0].mxu0 %v694
      %v696 = vpop.f32.mrb[0].mxu0
      %v697 = vadd.f32 %v566, %v696
      %v698 = vpop.f32.mrb[0].mxu0
      %699 = vdwg.mxu0
      %700 = vmatprep.subr.mxu0 0.0
      %v701 = vand.u32 %v139, 4294901760
      %v702 = vsub.f32 %v139, %v701
      %v703 = vand.u32 %v702, 4294901760
      %704 = vmatpush1.msra.mxu0 %v703
      %705 = vmatprep.subr.mxu0 0.0
      %v706 = vand.u32 %v140, 4294901760
      %v707 = vsub.f32 %v140, %v706
      %v708 = vand.u32 %v707, 4294901760
      %709 = vmatpush1.msra.mxu0 %v708
      %710 = vmatprep.subr.mxu0 0.0
      %711 = vmatpush1.msra.mxu0 0.0
      %712 = vmatprep.subr.mxu0 0.0
      %713 = vmatpush1.msra.mxu0 0.0
      %714 = vmatprep.subr.mxu0 0.0
      %715 = vmatpush1.msra.mxu0 0.0
      %716 = vmatprep.subr.mxu0 0.0
      %717 = vmatpush1.msra.mxu0 0.0
      %718 = vmatprep.subr.mxu0 0.0
      %719 = vmatpush1.msra.mxu0 0.0
      %720 = vmatprep.subr.mxu0 0.0
      %721 = vmatpush1.msra.mxu0 0.0
      %722 = vmatprep.subr.mxu0 0.0
      %723 = vmatpush1.msra.mxu0 0.0
      %724 = vmatprep.subr.mxu0 0.0
      %725 = vmatpush1.msra.mxu0 0.0
      %726 = vmatprep.subr.mxu0 0.0
      %727 = vmatpush1.msra.mxu0 0.0
      %728 = vmatprep.subr.mxu0 0.0
      %729 = vmatpush1.msra.mxu0 0.0
      %730 = vmatprep.subr.mxu0 0.0
      %731 = vmatpush1.msra.mxu0 0.0
      %732 = vmatprep.subr.mxu0 0.0
      %733 = vmatpush1.msra.mxu0 0.0
      %734 = vmatprep.subr.mxu0 0.0
      %735 = vmatpush1.msra.mxu0 0.0
      %736 = vmatprep.subr.mxu0 0.0
      %737 = vmatpush1.msra.mxu0 0.0
      %738 = vmatprep.subr.mxu0 0.0
      %739 = vmatpush1.msra.mxu0 0.0
      %740 = vmatprep.subr.mxu0 0.0
      %741 = vmatpush1.msra.mxu0 0.0
      %742 = vmatprep.subr.mxu0 0.0
      %743 = vmatpush1.msra.mxu0 0.0
      %744 = vmatprep.subr.mxu0 0.0
      %745 = vmatpush1.msra.mxu0 0.0
      %746 = vmatprep.subr.mxu0 0.0
      %747 = vmatpush1.msra.mxu0 0.0
      %748 = vmatprep.subr.mxu0 0.0
      %749 = vmatpush1.msra.mxu0 0.0
      %750 = vmatprep.subr.mxu0 0.0
      %751 = vmatpush1.msra.mxu0 0.0
      %752 = vmatprep.subr.mxu0 0.0
      %753 = vmatpush1.msra.mxu0 0.0
      %754 = vmatprep.subr.mxu0 0.0
      %755 = vmatpush1.msra.mxu0 0.0
      %756 = vmatprep.subr.mxu0 0.0
      %757 = vmatpush1.msra.mxu0 0.0
      %758 = vmatprep.subr.mxu0 0.0
      %759 = vmatpush1.msra.mxu0 0.0
      %760 = vmatprep.subr.mxu0 0.0
      %761 = vmatpush1.msra.mxu0 0.0
      %762 = vmatprep.subr.mxu0 0.0
      %763 = vmatpush1.msra.mxu0 0.0
      %764 = vmatprep.subr.mxu0 0.0
      %765 = vmatpush1.msra.mxu0 0.0
      %766 = vmatprep.subr.mxu0 0.0
      %767 = vmatpush1.msra.mxu0 0.0
      %768 = vmatprep.subr.mxu0 0.0
      %769 = vmatpush1.msra.mxu0 0.0
      %770 = vmatprep.mubr.f32.mxu0 0.0
      %v771 = vand.u32 %v151, 4294901760
      %772 = vmatmul.mubr.f32.gmra.mrb[0].mxu0 %v771
      %v773 = vpop.f32.mrb[0].mxu0
      %v774 = vadd.f32 %v641, %v773
      %v775 = vpop.f32.mrb[0].mxu0
      %776 = vmatprep.mubr.f32.mxu0 0.0
      %v777 = vand.u32 %v154, 4294901760
      %778 = vmatmul.mubr.f32.gmra.mrb[0].mxu0 %v777
      %v779 = vpop.f32.mrb[0].mxu0
      %v780 = vadd.f32 %v649, %v779
      %v781 = vpop.f32.mrb[0].mxu0
      %782 = vmatprep.mubr.f32.mxu0 0.0
      %v783 = vand.u32 %v157, 4294901760
      %784 = vmatmul.mubr.f32.gmra.mrb[0].mxu0 %v783
      %v785 = vpop.f32.mrb[0].mxu0
      %v786 = vadd.f32 %v657, %v785
      %v787 = vpop.f32.mrb[0].mxu0
      %788 = vmatprep.mubr.f32.mxu0 0.0
      %v789 = vand.u32 %v160, 4294901760
      %790 = vmatmul.mubr.f32.gmra.mrb[0].mxu0 %v789
      %v791 = vpop.f32.mrb[0].mxu0
      %v792 = vadd.f32 %v665, %v791
      %v793 = vpop.f32.mrb[0].mxu0
      %794 = vmatprep.mubr.f32.mxu0 0.0
      %v795 = vand.u32 %v163, 4294901760
      %796 = vmatmul.mubr.f32.gmra.mrb[0].mxu0 %v795
      %v797 = vpop.f32.mrb[0].mxu0
      %v798 = vadd.f32 %v673, %v797
      %v799 = vpop.f32.mrb[0].mxu0
      %800 = vmatprep.mubr.f32.mxu0 0.0
      %v801 = vand.u32 %v166, 4294901760
      %802 = vmatmul.mubr.f32.gmra.mrb[0].mxu0 %v801
      %v803 = vpop.f32.mrb[0].mxu0
      %v804 = vadd.f32 %v681, %v803
      %v805 = vpop.f32.mrb[0].mxu0
      %806 = vmatprep.mubr.f32.mxu0 0.0
      %v807 = vand.u32 %v169, 4294901760
      %808 = vmatmul.mubr.f32.gmra.mrb[0].mxu0 %v807
      %v809 = vpop.f32.mrb[0].mxu0
      %v810 = vadd.f32 %v689, %v809
      %v811 = vpop.f32.mrb[0].mxu0
      %812 = vmatprep.mubr.f32.mxu0 0.0
      %v813 = vand.u32 %v172, 4294901760
      %814 = vmatmul.mubr.f32.gmra.mrb[0].mxu0 %v813
      %v815 = vpop.f32.mrb[0].mxu0
      %v816 = vadd.f32 %v697, %v815
      %v817 = vpop.f32.mrb[0].mxu0
      %818 = vdwg.mxu0
      %819 = vmatprep.subr.mxu0 0.0
      %v820 = vand.u32 %v139, 4294901760
      %821 = vmatpush1.msra.mxu0 %v820
      %822 = vmatprep.subr.mxu0 0.0
      %v823 = vand.u32 %v140, 4294901760
      %824 = vmatpush1.msra.mxu0 %v823
      %825 = vmatprep.subr.mxu0 0.0
      %826 = vmatpush1.msra.mxu0 0.0
      %827 = vmatprep.subr.mxu0 0.0
      %828 = vmatpush1.msra.mxu0 0.0
      %829 = vmatprep.subr.mxu0 0.0
      %830 = vmatpush1.msra.mxu0 0.0
      %831 = vmatprep.subr.mxu0 0.0
      %832 = vmatpush1.msra.mxu0 0.0
      %833 = vmatprep.subr.mxu0 0.0
      %834 = vmatpush1.msra.mxu0 0.0
      %835 = vmatprep.subr.mxu0 0.0
      %836 = vmatpush1.msra.mxu0 0.0
      %837 = vmatprep.subr.mxu0 0.0
      %838 = vmatpush1.msra.mxu0 0.0
      %839 = vmatprep.subr.mxu0 0.0
      %840 = vmatpush1.msra.mxu0 0.0
      %841 = vmatprep.subr.mxu0 0.0
      %842 = vmatpush1.msra.mxu0 0.0
      %843 = vmatprep.subr.mxu0 0.0
      %844 = vmatpush1.msra.mxu0 0.0
      %845 = vmatprep.subr.mxu0 0.0
      %846 = vmatpush1.msra.mxu0 0.0
      %847 = vmatprep.subr.mxu0 0.0
      %848 = vmatpush1.msra.mxu0 0.0
      %849 = vmatprep.subr.mxu0 0.0
      %850 = vmatpush1.msra.mxu0 0.0
      %851 = vmatprep.subr.mxu0 0.0
      %852 = vmatpush1.msra.mxu0 0.0
      %853 = vmatprep.subr.mxu0 0.0
      %854 = vmatpush1.msra.mxu0 0.0
      %855 = vmatprep.subr.mxu0 0.0
      %856 = vmatpush1.msra.mxu0 0.0
      %857 = vmatprep.subr.mxu0 0.0
      %858 = vmatpush1.msra.mxu0 0.0
      %859 = vmatprep.subr.mxu0 0.0
      %860 = vmatpush1.msra.mxu0 0.0
      %861 = vmatprep.subr.mxu0 0.0
      %862 = vmatpush1.msra.mxu0 0.0
      %863 = vmatprep.subr.mxu0 0.0
      %864 = vmatpush1.msra.mxu0 0.0
      %865 = vmatprep.subr.mxu0 0.0
      %866 = vmatpush1.msra.mxu0 0.0
      %867 = vmatprep.subr.mxu0 0.0
      %868 = vmatpush1.msra.mxu0 0.0
      %869 = vmatprep.subr.mxu0 0.0
      %870 = vmatpush1.msra.mxu0 0.0
      %871 = vmatprep.subr.mxu0 0.0
      %872 = vmatpush1.msra.mxu0 0.0
      %873 = vmatprep.subr.mxu0 0.0
      %874 = vmatpush1.msra.mxu0 0.0
      %875 = vmatprep.subr.mxu0 0.0
      %876 = vmatpush1.msra.mxu0 0.0
      %877 = vmatprep.subr.mxu0 0.0
      %878 = vmatpush1.msra.mxu0 0.0
      %879 = vmatprep.subr.mxu0 0.0
      %880 = vmatpush1.msra.mxu0 0.0
      %881 = vmatprep.subr.mxu0 0.0
      %882 = vmatpush1.msra.mxu0 0.0
      %883 = vmatprep.subr.mxu0 0.0
      %884 = vmatpush1.msra.mxu0 0.0
      %885 = vmatprep.mubr.f32.mxu0 0.0
      %v886 = vand.u32 %v151, 4294901760
      %887 = vmatmul.mubr.f32.gmra.mrb[0].mxu0 %v886
      %v888 = vpop.f32.mrb[0].mxu0
      %v889 = vadd.f32 %v774, %v888
      %v890 = vpop.f32.mrb[0].mxu0
      %891 = vmatprep.mubr.f32.mxu0 0.0
      %v892 = vand.u32 %v154, 4294901760
      %893 = vmatmul.mubr.f32.gmra.mrb[0].mxu0 %v892
      %v894 = vpop.f32.mrb[0].mxu0
      %v895 = vadd.f32 %v780, %v894
      %v896 = vpop.f32.mrb[0].mxu0
      %897 = vmatprep.mubr.f32.mxu0 0.0
      %v898 = vand.u32 %v157, 4294901760
      %899 = vmatmul.mubr.f32.gmra.mrb[0].mxu0 %v898
      %v900 = vpop.f32.mrb[0].mxu0
      %v901 = vadd.f32 %v786, %v900
      %v902 = vpop.f32.mrb[0].mxu0
      %903 = vmatprep.mubr.f32.mxu0 0.0
      %v904 = vand.u32 %v160, 4294901760
      %905 = vmatmul.mubr.f32.gmra.mrb[0].mxu0 %v904
      %v906 = vpop.f32.mrb[0].mxu0
      %v907 = vadd.f32 %v792, %v906
      %v908 = vpop.f32.mrb[0].mxu0
      %909 = vmatprep.mubr.f32.mxu0 0.0
      %v910 = vand.u32 %v163, 4294901760
      %911 = vmatmul.mubr.f32.gmra.mrb[0].mxu0 %v910
      %v912 = vpop.f32.mrb[0].mxu0
      %v913 = vadd.f32 %v798, %v912
      %v914 = vpop.f32.mrb[0].mxu0
      %915 = vmatprep.mubr.f32.mxu0 0.0
      %v916 = vand.u32 %v166, 4294901760
      %917 = vmatmul.mubr.f32.gmra.mrb[0].mxu0 %v916
      %v918 = vpop.f32.mrb[0].mxu0
      %v919 = vadd.f32 %v804, %v918
      %v920 = vpop.f32.mrb[0].mxu0
      %921 = vmatprep.mubr.f32.mxu0 0.0
      %v922 = vand.u32 %v169, 4294901760
      %923 = vmatmul.mubr.f32.gmra.mrb[0].mxu0 %v922
      %v924 = vpop.f32.mrb[0].mxu0
      %v925 = vadd.f32 %v810, %v924
      %v926 = vpop.f32.mrb[0].mxu0
      %927 = vmatprep.mubr.f32.mxu0 0.0
      %v928 = vand.u32 %v172, 4294901760
      %929 = vmatmul.mubr.f32.gmra.mrb[0].mxu0 %v928
      %v930 = vpop.f32.mrb[0].mxu0
      %v931 = vadd.f32 %v816, %v930
      %v932 = vpop.f32.mrb[0].mxu0
      %933 = vdwg.mxu0
      %vm934 = vcmask 261120
      %935 = vst.msk [vmem:[%s118] sm:$0xff] %vm934, %v889
      %936 = vst.msk [vmem:[%s118 + $0x8] sm:$0xff] %vm934, %v895
      %937 = vst.msk [vmem:[%s118 + $0x10] sm:$0xff] %vm934, %v901
      %938 = vst.msk [vmem:[%s118 + $0x18] sm:$0xff] %vm934, %v907
      %939 = vst.msk [vmem:[%s118 + $0x20] sm:$0xff] %vm934, %v913
      %940 = vst.msk [vmem:[%s118 + $0x28] sm:$0xff] %vm934, %v919
      %941 = vst.msk [vmem:[%s118 + $0x30] sm:$0xff] %vm934, %v925
      %942 = vst.msk [vmem:[%s118 + $0x38] sm:$0xff] %vm934, %v931
      %951 = vrot.lane.b32.xlu0 %v889, 32
      %v952 = vpop.permute.xlu0 %951
      %953 = vrot.lane.b32.xlu0 %v895, 32
      %v954 = vpop.permute.xlu0 %953
      %955 = vrot.lane.b32.xlu0 %v901, 32
      %v956 = vpop.permute.xlu0 %955
      %957 = vrot.lane.b32.xlu0 %v907, 32
      %v958 = vpop.permute.xlu0 %957
      %959 = vrot.lane.b32.xlu0 %v913, 32
      %v960 = vpop.permute.xlu0 %959
      %961 = vrot.lane.b32.xlu0 %v919, 32
      %v962 = vpop.permute.xlu0 %961
      %963 = vrot.lane.b32.xlu0 %v925, 32
      %v964 = vpop.permute.xlu0 %963
      %965 = vrot.lane.b32.xlu0 %v931, 32
      %v966 = vpop.permute.xlu0 %965
      %vm975 = vcmask 523520
      %976 = vst.msk [vmem:[%s118] sm:$0xff] %vm975, %v952
      %977 = vst.msk [vmem:[%s118 + $0x8] sm:$0xff] %vm975, %v954
      %978 = vst.msk [vmem:[%s118 + $0x10] sm:$0xff] %vm975, %v956
      %979 = vst.msk [vmem:[%s118 + $0x18] sm:$0xff] %vm975, %v958
      %980 = vst.msk [vmem:[%s118 + $0x20] sm:$0xff] %vm975, %v960
      %981 = vst.msk [vmem:[%s118 + $0x28] sm:$0xff] %vm975, %v962
      %982 = vst.msk [vmem:[%s118 + $0x30] sm:$0xff] %vm975, %v964
      %983 = vst.msk [vmem:[%s118 + $0x38] sm:$0xff] %vm975, %v966
      %s984 = smul.u32 8, %s12
      %p985 = scmp.lt.s32.totalorder %s984, 15
      %s986 = scalar_select %p985, %s984, 15
      %s987 = smul.addr %s986, 8
      %s988 = scalar_lea.vmem %s1, %s987
      // Predicated region
      $region25: #{tpu_custom_call.1} parent=23 // pred_check
        %p989 = pneg %p56
      $region26: #{tpu_custom_call.1} parent=23 // pred_check_branch
        %991 = sbr.rel (%p989) target = $region28
      $region27: #{tpu_custom_call.1} parent=23 // pred_region
        %s992 = smul.u32 8, %s12
      $region28: #{tpu_custom_call.1} parent=23 // pred_fallthru
        _
    $region24: #{tpu_custom_call.1} parent=5 // pred_fallthru
      _
    %p993 = scmp.le.s32.totalorder 2, %s7
    // Predicated region
    $region29: #{tpu_custom_call.1} parent=5 // pred_check
      %p994 = pneg %p993
    $region30: #{tpu_custom_call.1} parent=5 // pred_check_branch
      %996 = sbr.rel (%p994) target = $region32
    $region31: #{tpu_custom_call.1} parent=5 // pred_region
      %s997 = ssub.s32 %s7, 2
      // Predicated region
      $region33: #{tpu_custom_call.1} parent=31 // pred_check
        %p998 = pneg %p62
      $region34: #{tpu_custom_call.1} parent=31 // pred_check_branch
        %1000 = sbr.rel (%p998) target = $region36
      $region35: #{tpu_custom_call.1} parent=31 // pred_region
        %s1001 = smul.u32 8, %s13
        %p1002 = scmp.lt.s32.totalorder %s1001, 15
        %s1003 = scalar_select %p1002, %s1001, 15
        %s1004 = smul.addr %s1003, 8
        %s1005 = scalar_lea.vmem %s1, %s1004
      $region36: #{tpu_custom_call.1} parent=31 // pred_fallthru
        _
    $region32: #{tpu_custom_call.1} parent=5 // pred_fallthru
      _
  $region6: #{tpu_custom_call.1} parent=0 // loop_footer
    %s11 = sadd.s32 1, %s7
  $region7: #{tpu_custom_call.1} parent=0 // loop_footer_branch
    %6 = sbr.rel target = $region3
  $region8: #{tpu_custom_call.1} parent=0 // loop_exit
    _

</llo_original>
